<compile_context>
chip_gen: v6e
topology: v6e:2x2x1
jax: 0.10.0
libtpu: 0.0.40
codegen_flags: <defaults>
</compile_context>

<pallas_src>
import functools

import jax
import jax.numpy as jnp
import numpy as np
from jax.experimental import pallas as pl
from jax.experimental.pallas import tpu as pltpu


def _flow_kernel(x_ref, ldw_ref, w1_ref, b1_ref, w2_ref, b2_ref, w3_ref, b3_ref,
                 z_ref, ld_ref, *, n_flows, half_dim):
    x = x_ref[...]                             # (TB, D) f32
    x1 = x[:, :half_dim]                       # passes through every flow unchanged
    x2 = x[:, half_dim:]

    # Fused matmuls (all depend only on x1): bf16 on the MXU, f32 accumulation.
    x1b = x1.astype(jnp.bfloat16)
    h = jnp.dot(x1b, w1_ref[...], preferred_element_type=jnp.float32) + b1_ref[...]
    h = jnp.maximum(h, 0.0)                    # ReLU
    h = jnp.dot(h.astype(jnp.bfloat16), w2_ref[...],
                preferred_element_type=jnp.float32) + b2_ref[...]
    h = jnp.maximum(h, 0.0)                    # ReLU
    out = jnp.dot(h.astype(jnp.bfloat16), w3_ref[...],
                  preferred_element_type=jnp.float32) + b3_ref[...]

    # Layer-3 columns were pre-reordered to [s_0..s_{F-1} | t_0..t_{F-1}].
    fh = n_flows * half_dim
    s_all = jnp.tanh(out[:, :fh])              # one lane-dense EUP pass
    t_all = out[:, fh:]
    es_all = jnp.exp(s_all)                    # one lane-dense EUP pass

    # Cheap sequential elementwise chain (VPU only), statically unrolled.
    for i in range(n_flows):
        lo = i * half_dim
        x2 = x2 * es_all[:, lo:lo + half_dim] + t_all[:, lo:lo + half_dim]

    # log_det with the PyTorch in-place aliasing semantics folded into one
    # weighted lane reduction: L_F = sum_i 2^(F-i) * sum(s_i).
    ld_ref[...] = jnp.sum(s_all * ldw_ref[...], axis=1, keepdims=True)

    z_ref[:, :half_dim] = x1.astype(z_ref.dtype)
    z_ref[:, half_dim:] = x2.astype(z_ref.dtype)


def init_params(key, dim, n_flows):
    """Deterministic synthetic parameters (shapes match the PyTorch module)."""
    half = dim // 2
    ks = jax.random.split(key, 6)
    scale = 0.1
    w1s = scale * jax.random.normal(ks[0], (n_flows, half, dim), jnp.float32)
    b1s = scale * jax.random.normal(ks[1], (n_flows, 1, dim), jnp.float32)
    w2s = scale * jax.random.normal(ks[2], (n_flows, dim, dim), jnp.float32)
    b2s = scale * jax.random.normal(ks[3], (n_flows, 1, dim), jnp.float32)
    w3s = scale * jax.random.normal(ks[4], (n_flows, dim, 2 * half), jnp.float32)
    b3s = scale * jax.random.normal(ks[5], (n_flows, 1, 2 * half), jnp.float32)
    return w1s, b1s, w2s, b2s, w3s, b3s


def fuse_params(params):
    """One-time fusion of per-flow weights into MXU-friendly bf16 matrices.

    Hoisted out of the per-forward path: call once when parameters are created.
    """
    w1s, b1s, w2s, b2s, w3s, b3s = params
    n_flows, half, dim = w1s.shape

    def block_diag(blocks):
        r, c = blocks[0].shape
        out = jnp.zeros((len(blocks) * r, len(blocks) * c), blocks[0].dtype)
        for i, b in enumerate(blocks):
            out = out.at[i * r:(i + 1) * r, i * c:(i + 1) * c].set(b)
        return out

    # Layer 1: shared input x1 -> concat along the output axis (no wasted FLOPs).
    w1cat = jnp.concatenate([w1s[i] for i in range(n_flows)], axis=1)   # (half, F*dim)
    b1cat = jnp.concatenate([b1s[i] for i in range(n_flows)], axis=1)   # (1, F*dim)
    # Layer 2: block-diagonal (per-flow hidden states stay in their own lanes).
    w2blk = block_diag([w2s[i] for i in range(n_flows)])                # (F*dim, F*dim)
    b2cat = jnp.concatenate([b2s[i] for i in range(n_flows)], axis=1)
    # Layer 3: block-diagonal, output columns reordered to [all s | all t].
    w3blk = jnp.concatenate(
        [block_diag([w3s[i][:, :half] for i in range(n_flows)]),
         block_diag([w3s[i][:, half:] for i in range(n_flows)])], axis=1)
    b3cat = jnp.concatenate(
        [jnp.concatenate([b3s[i][:, :half] for i in range(n_flows)], axis=1),
         jnp.concatenate([b3s[i][:, half:] for i in range(n_flows)], axis=1)], axis=1)
    # Per-flow log_det weights 2^(F-i), broadcast over the half_dim lanes of s_i.
    ld_w = np.repeat(2.0 ** (n_flows - np.arange(n_flows)), half).astype(np.float32)
    return (w1cat.astype(jnp.bfloat16), b1cat.astype(jnp.float32),
            w2blk.astype(jnp.bfloat16), b2cat.astype(jnp.float32),
            w3blk.astype(jnp.bfloat16), b3cat.astype(jnp.float32),
            jnp.asarray(ld_w)[None, :])


def normalizing_flow_forward(x, fused, *, block_rows=4096):
    """Returns (z, log_det) matching NormalizingFlow.forward."""
    B, D = x.shape
    assert D % 2 == 0, "dim must be even"
    half = D // 2
    w1, b1, w2, b2, w3, b3, ld_w = fused
    n_flows = w1.shape[1] // D

    # Batch tile: large tiles for big batches (fewer grid-step overheads), and
    # for small batches split into >=2 tiles so the 'parallel' axis can use
    # both TensorCores on v7x (no-op on v5e/v6e).
    block_rows = max(8, (block_rows // 8) * 8)
    if B > block_rows:
        tb = block_rows
    elif B <= 8:
        tb = B
    else:
        tb = min(B, ((pl.cdiv(B, 2) + 7) // 8) * 8)
    grid = (pl.cdiv(B, tb),)

    xz_spec = pl.BlockSpec((tb, D), lambda i: (i, 0))
    ld_spec = pl.BlockSpec((tb, 1), lambda i: (i, 0))

    def const_spec(arr):
        # Constant block index -> DMA'd once, resident in VMEM across the grid.
        return pl.BlockSpec(arr.shape, lambda i: (0, 0))

    kernel = functools.partial(_flow_kernel, n_flows=n_flows, half_dim=half)

    # Useful FLOPs only (block-diagonal zeros excluded).
    flops = int(2 * B * n_flows * D * (half + 2 * D))
    transcendentals = int(2 * B * n_flows * half)                 # tanh + exp
    fd = n_flows * D
    bytes_accessed = int(4 * (2 * B * D + B)                      # x read + z write + ld
                         + 2 * (half * fd + 2 * fd * fd)          # bf16 weights
                         + 4 * (3 * fd + n_flows * half))         # f32 biases + ld_w

    z, ld = pl.pallas_call(
        kernel,
        out_shape=(jax.ShapeDtypeStruct((B, D), x.dtype),
                   jax.ShapeDtypeStruct((B, 1), jnp.float32)),
        grid=grid,
        in_specs=[xz_spec, const_spec(ld_w),
                  const_spec(w1), const_spec(b1),
                  const_spec(w2), const_spec(b2),
                  const_spec(w3), const_spec(b3)],
        out_specs=(xz_spec, ld_spec),
        input_output_aliases={0: 0},          # z reuses x's HBM buffer
        compiler_params=pltpu.CompilerParams(
            dimension_semantics=("parallel",),
            vmem_limit_bytes=32 * 1024 * 1024),
        cost_estimate=pl.CostEstimate(flops=flops,
                                      transcendentals=transcendentals,
                                      bytes_accessed=bytes_accessed),
    )(x, ld_w, w1, b1, w2, b2, w3, b3)
    return z, ld[:, 0]


def reference_forward(x, params, matmul_dtype=jnp.float32):
    """Pure-JAX per-flow reference with the same (aliased) log_det semantics.

    matmul_dtype=bf16 reproduces the kernel's MXU numerics for a tight check.
    """
    w1s, b1s, w2s, b2s, w3s, b3s = params
    B, D = x.shape
    half = D // 2
    c = lambda a: a.astype(matmul_dtype)
    x1 = x[:, :half]
    x2 = x[:, half:]
    ld = jnp.zeros((B,), jnp.float32)
    for i in range(w1s.shape[0]):
        h = jax.nn.relu(jnp.dot(c(x1), c(w1s[i]), preferred_element_type=jnp.float32) + b1s[i])
        h = jax.nn.relu(jnp.dot(c(h), c(w2s[i]), preferred_element_type=jnp.float32) + b2s[i])
        out = jnp.dot(c(h), c(w3s[i]), preferred_element_type=jnp.float32) + b3s[i]
        s = jnp.tanh(out[:, :half])
        t = out[:, half:]
        x2 = x2 * jnp.exp(s) + t
        ld = 2.0 * (ld + jnp.sum(s, axis=1))   # in-place aliasing -> doubling
    return jnp.concatenate([x1, x2], axis=1), ld


if __name__ == "__main__":
    key = jax.random.PRNGKey(0)
    k_x, k_p, k_xb, k_xc = jax.random.split(key, 4)

    dim, n_flows = 32, 4
    params = init_params(k_p, dim, n_flows)
    fused = fuse_params(params)                # hoisted: fuse once, reuse
    jax.block_until_ready(fused)

    def check(x, z, ld):
        # Tight check vs a reference using the same bf16-MXU numerics.
        z_bf, ld_bf = reference_forward(x, params, matmul_dtype=jnp.bfloat16)
        np.testing.assert_allclose(np.asarray(z), np.asarray(z_bf), rtol=1e-3, atol=1e-3)
        np.testing.assert_allclose(np.asarray(ld), np.asarray(ld_bf), rtol=1e-3, atol=1e-3)
        # Loose check vs the full-f32 reference (bf16 MXU precision tradeoff).
        z_f, ld_f = reference_forward(x, params)
        np.testing.assert_allclose(np.asarray(z), np.asarray(z_f), rtol=5e-2, atol=5e-2)
        np.testing.assert_allclose(np.asarray(ld), np.asarray(ld_f), rtol=5e-2, atol=2.5e-1)

    # Case 1: small batch, single grid step.
    batch = 8
    x = jax.random.normal(k_x, (batch, dim), jnp.float32)
    z, log_det = normalizing_flow_forward(x, fused)
    jax.block_until_ready((z, log_det))
    assert z.shape == (batch, dim) and log_det.shape == (batch,)
    check(x, z, log_det)

    # Case 2: multi-step batch grid (resident weights, pipelined row tiles).
    batch_b = 48
    xb = jax.random.normal(k_xb, (batch_b, dim), jnp.float32)
    zb, ldb = normalizing_flow_forward(xb, fused, block_rows=16)
    jax.block_until_ready((zb, ldb))
    check(xb, zb, ldb)

    # Case 3: default tiling path (batch auto-split into >=2 tiles for v7x).
    batch_c = 256
    xc = jax.random.normal(k_xc, (batch_c, dim), jnp.float32)
    zc, ldc = normalizing_flow_forward(xc, fused)
    jax.block_until_ready((zc, ldc))
    check(xc, zc, ldc)

    # TODO(synk): NormalizingFlow.inverse is not implemented (forward only).
    print("KERNEL_OK")
</pallas_src>

<mosaic_0001>
module attributes {stable_mosaic.version = 11 : i64} {
  func.func @_flow_kernel(%arg0: i32, %arg1: memref<8x32xf32, #tpu.memory_space<vmem>>, %arg2: memref<1x64xf32, #tpu.memory_space<vmem>>, %arg3: memref<16x128xbf16, #tpu.memory_space<vmem>>, %arg4: memref<1x128xf32, #tpu.memory_space<vmem>>, %arg5: memref<128x128xbf16, #tpu.memory_space<vmem>>, %arg6: memref<1x128xf32, #tpu.memory_space<vmem>>, %arg7: memref<128x128xbf16, #tpu.memory_space<vmem>>, %arg8: memref<1x128xf32, #tpu.memory_space<vmem>>, %arg9: memref<8x32xf32, #tpu.memory_space<vmem>>, %arg10: memref<8x1xf32, #tpu.memory_space<vmem>>) attributes {dimension_semantics = [#tpu.dimension_semantics<parallel>], iteration_bounds = array<i64: 1>, scalar_prefetch = 0 : i64, scratch_operands = 0 : i64, tpu.core_type = #tpu.core_type<tc>, window_params = [{transform_indices = @transform_0, window_bounds = array<i64: 8, 32>}, {pipeline_mode = #tpu.pipeline_mode<synchronous>, transform_indices = @transform_1, window_bounds = array<i64: 1, 64>}, {pipeline_mode = #tpu.pipeline_mode<synchronous>, transform_indices = @transform_2, window_bounds = array<i64: 16, 128>}, {pipeline_mode = #tpu.pipeline_mode<synchronous>, transform_indices = @transform_3, window_bounds = array<i64: 1, 128>}, {pipeline_mode = #tpu.pipeline_mode<synchronous>, transform_indices = @transform_4, window_bounds = array<i64: 128, 128>}, {pipeline_mode = #tpu.pipeline_mode<synchronous>, transform_indices = @transform_5, window_bounds = array<i64: 1, 128>}, {pipeline_mode = #tpu.pipeline_mode<synchronous>, transform_indices = @transform_6, window_bounds = array<i64: 128, 128>}, {pipeline_mode = #tpu.pipeline_mode<synchronous>, transform_indices = @transform_7, window_bounds = array<i64: 1, 128>}, {transform_indices = @transform_8, window_bounds = array<i64: 8, 32>}, {transform_indices = @transform_9, window_bounds = array<i64: 8, 1>}]} {
    %c0 = arith.constant 0 : index
    %c0_0 = arith.constant 0 : index
    %0 = vector.load %arg1[%c0, %c0_0] : memref<8x32xf32, #tpu.memory_space<vmem>>, vector<8x32xf32>
    %1 = vector.extract_strided_slice %0 {offsets = [0, 0], sizes = [8, 16], strides = [1, 1]} : vector<8x32xf32> to vector<8x16xf32>
    %2 = vector.extract_strided_slice %0 {offsets = [0, 16], sizes = [8, 16], strides = [1, 1]} : vector<8x32xf32> to vector<8x16xf32>
    %3 = arith.truncf %1 : vector<8x16xf32> to vector<8x16xbf16>
    %c0_1 = arith.constant 0 : index
    %c0_2 = arith.constant 0 : index
    %4 = vector.load %arg3[%c0_1, %c0_2] : memref<16x128xbf16, #tpu.memory_space<vmem>>, vector<16x128xbf16>
    %cst = arith.constant dense<0.000000e+00> : vector<8x128xf32>
    %5 = tpu.matmul %3, %4, %cst {dimension_numbers = #tpu.dot_dimension_numbers<[1], [0], [0], [1], [0, 0, 1, 1], [], []>} : vector<8x16xbf16>, vector<16x128xbf16>, vector<8x128xf32> -> vector<8x128xf32>
    %c0_3 = arith.constant 0 : index
    %c0_4 = arith.constant 0 : index
    %6 = vector.load %arg4[%c0_3, %c0_4] : memref<1x128xf32, #tpu.memory_space<vmem>>, vector<1x128xf32>
    %7 = vector.broadcast %6 : vector<1x128xf32> to vector<8x128xf32>
    %8 = arith.addf %5, %7 : vector<8x128xf32>
    %cst_5 = arith.constant 0.000000e+00 : f32
    %9 = vector.broadcast %cst_5 : f32 to vector<8x128xf32>
    %10 = arith.maximumf %8, %9 : vector<8x128xf32>
    %11 = arith.truncf %10 : vector<8x128xf32> to vector<8x128xbf16>
    %c0_6 = arith.constant 0 : index
    %c0_7 = arith.constant 0 : index
    %12 = vector.load %arg5[%c0_6, %c0_7] : memref<128x128xbf16, #tpu.memory_space<vmem>>, vector<128x128xbf16>
    %cst_8 = arith.constant dense<0.000000e+00> : vector<8x128xf32>
    %13 = tpu.matmul %11, %12, %cst_8 {dimension_numbers = #tpu.dot_dimension_numbers<[1], [0], [0], [1], [0, 0, 1, 1], [], []>} : vector<8x128xbf16>, vector<128x128xbf16>, vector<8x128xf32> -> vector<8x128xf32>
    %c0_9 = arith.constant 0 : index
    %c0_10 = arith.constant 0 : index
    %14 = vector.load %arg6[%c0_9, %c0_10] : memref<1x128xf32, #tpu.memory_space<vmem>>, vector<1x128xf32>
    %15 = vector.broadcast %14 : vector<1x128xf32> to vector<8x128xf32>
    %16 = arith.addf %13, %15 : vector<8x128xf32>
    %cst_11 = arith.constant 0.000000e+00 : f32
    %17 = vector.broadcast %cst_11 : f32 to vector<8x128xf32>
    %18 = arith.maximumf %16, %17 : vector<8x128xf32>
    %19 = arith.truncf %18 : vector<8x128xf32> to vector<8x128xbf16>
    %c0_12 = arith.constant 0 : index
    %c0_13 = arith.constant 0 : index
    %20 = vector.load %arg7[%c0_12, %c0_13] : memref<128x128xbf16, #tpu.memory_space<vmem>>, vector<128x128xbf16>
    %cst_14 = arith.constant dense<0.000000e+00> : vector<8x128xf32>
    %21 = tpu.matmul %19, %20, %cst_14 {dimension_numbers = #tpu.dot_dimension_numbers<[1], [0], [0], [1], [0, 0, 1, 1], [], []>} : vector<8x128xbf16>, vector<128x128xbf16>, vector<8x128xf32> -> vector<8x128xf32>
    %c0_15 = arith.constant 0 : index
    %c0_16 = arith.constant 0 : index
    %22 = vector.load %arg8[%c0_15, %c0_16] : memref<1x128xf32, #tpu.memory_space<vmem>>, vector<1x128xf32>
    %23 = vector.broadcast %22 : vector<1x128xf32> to vector<8x128xf32>
    %24 = arith.addf %21, %23 : vector<8x128xf32>
    %25 = vector.extract_strided_slice %24 {offsets = [0, 0], sizes = [8, 64], strides = [1, 1]} : vector<8x128xf32> to vector<8x64xf32>
    %26 = math.tanh %25 : vector<8x64xf32>
    %27 = vector.extract_strided_slice %24 {offsets = [0, 64], sizes = [8, 64], strides = [1, 1]} : vector<8x128xf32> to vector<8x64xf32>
    %28 = math.exp %26 : vector<8x64xf32>
    %29 = vector.extract_strided_slice %28 {offsets = [0, 0], sizes = [8, 16], strides = [1, 1]} : vector<8x64xf32> to vector<8x16xf32>
    %30 = arith.mulf %2, %29 : vector<8x16xf32>
    %31 = vector.extract_strided_slice %27 {offsets = [0, 0], sizes = [8, 16], strides = [1, 1]} : vector<8x64xf32> to vector<8x16xf32>
    %32 = arith.addf %30, %31 : vector<8x16xf32>
    %33 = vector.extract_strided_slice %28 {offsets = [0, 16], sizes = [8, 16], strides = [1, 1]} : vector<8x64xf32> to vector<8x16xf32>
    %34 = arith.mulf %32, %33 : vector<8x16xf32>
    %35 = vector.extract_strided_slice %27 {offsets = [0, 16], sizes = [8, 16], strides = [1, 1]} : vector<8x64xf32> to vector<8x16xf32>
    %36 = arith.addf %34, %35 : vector<8x16xf32>
    %37 = vector.extract_strided_slice %28 {offsets = [0, 32], sizes = [8, 16], strides = [1, 1]} : vector<8x64xf32> to vector<8x16xf32>
    %38 = arith.mulf %36, %37 : vector<8x16xf32>
    %39 = vector.extract_strided_slice %27 {offsets = [0, 32], sizes = [8, 16], strides = [1, 1]} : vector<8x64xf32> to vector<8x16xf32>
    %40 = arith.addf %38, %39 : vector<8x16xf32>
    %41 = vector.extract_strided_slice %28 {offsets = [0, 48], sizes = [8, 16], strides = [1, 1]} : vector<8x64xf32> to vector<8x16xf32>
    %42 = arith.mulf %40, %41 : vector<8x16xf32>
    %43 = vector.extract_strided_slice %27 {offsets = [0, 48], sizes = [8, 16], strides = [1, 1]} : vector<8x64xf32> to vector<8x16xf32>
    %44 = arith.addf %42, %43 : vector<8x16xf32>
    %c0_17 = arith.constant 0 : index
    %c0_18 = arith.constant 0 : index
    %45 = vector.load %arg2[%c0_17, %c0_18] : memref<1x64xf32, #tpu.memory_space<vmem>>, vector<1x64xf32>
    %46 = vector.broadcast %45 : vector<1x64xf32> to vector<8x64xf32>
    %47 = arith.mulf %26, %46 : vector<8x64xf32>
    %cst_19 = arith.constant dense<0.000000e+00> : vector<8xf32>
    %48 = vector.multi_reduction <add>, %47, %cst_19 [1] : vector<8x64xf32> to vector<8xf32>
    %49 = vector.shape_cast %48 : vector<8xf32> to vector<8x1xf32>
    %c0_20 = arith.constant 0 : index
    %c0_21 = arith.constant 0 : index
    %50 = vector.load %arg10[%c0_20, %c0_21] : memref<8x1xf32, #tpu.memory_space<vmem>>, vector<8x1xf32>
    tpu.vector_store %arg10[%c0_20, %c0_21], %49 {strides = array<i32>} : memref<8x1xf32, #tpu.memory_space<vmem>>, vector<8x1xf32>,
    %c0_22 = arith.constant 0 : index
    %c0_23 = arith.constant 0 : index
    %51 = vector.load %arg9[%c0_22, %c0_23] : memref<8x32xf32, #tpu.memory_space<vmem>>, vector<8x16xf32>
    tpu.vector_store %arg9[%c0_22, %c0_23], %1 {strides = array<i32>} : memref<8x32xf32, #tpu.memory_space<vmem>>, vector<8x16xf32>,
    %c0_24 = arith.constant 0 : index
    %c16 = arith.constant 16 : index
    %52 = vector.load %arg9[%c0_24, %c16] : memref<8x32xf32, #tpu.memory_space<vmem>>, vector<8x16xf32>
    tpu.vector_store %arg9[%c0_24, %c16], %44 {strides = array<i32>} : memref<8x32xf32, #tpu.memory_space<vmem>>, vector<8x16xf32>,
    return
  }
  func.func @transform_0(%arg0: i32) -> (i32, i32) {
    %c0_i32 = arith.constant 0 : i32
    %c0_i32_0 = arith.constant 0 : i32
    return %arg0, %c0_i32 : i32, i32
  }
  func.func @transform_1(%arg0: i32) -> (i32, i32) {
    %c0_i32 = arith.constant 0 : i32
    %c0_i32_0 = arith.constant 0 : i32
    %c0_i32_1 = arith.constant 0 : i32
    return %c0_i32, %c0_i32_0 : i32, i32
  }
  func.func @transform_2(%arg0: i32) -> (i32, i32) {
    %c0_i32 = arith.constant 0 : i32
    %c0_i32_0 = arith.constant 0 : i32
    %c0_i32_1 = arith.constant 0 : i32
    return %c0_i32, %c0_i32_0 : i32, i32
  }
  func.func @transform_3(%arg0: i32) -> (i32, i32) {
    %c0_i32 = arith.constant 0 : i32
    %c0_i32_0 = arith.constant 0 : i32
    %c0_i32_1 = arith.constant 0 : i32
    return %c0_i32, %c0_i32_0 : i32, i32
  }
  func.func @transform_4(%arg0: i32) -> (i32, i32) {
    %c0_i32 = arith.constant 0 : i32
    %c0_i32_0 = arith.constant 0 : i32
    %c0_i32_1 = arith.constant 0 : i32
    return %c0_i32, %c0_i32_0 : i32, i32
  }
  func.func @transform_5(%arg0: i32) -> (i32, i32) {
    %c0_i32 = arith.constant 0 : i32
    %c0_i32_0 = arith.constant 0 : i32
    %c0_i32_1 = arith.constant 0 : i32
    return %c0_i32, %c0_i32_0 : i32, i32
  }
  func.func @transform_6(%arg0: i32) -> (i32, i32) {
    %c0_i32 = arith.constant 0 : i32
    %c0_i32_0 = arith.constant 0 : i32
    %c0_i32_1 = arith.constant 0 : i32
    return %c0_i32, %c0_i32_0 : i32, i32
  }
  func.func @transform_7(%arg0: i32) -> (i32, i32) {
    %c0_i32 = arith.constant 0 : i32
    %c0_i32_0 = arith.constant 0 : i32
    %c0_i32_1 = arith.constant 0 : i32
    return %c0_i32, %c0_i32_0 : i32, i32
  }
  func.func @transform_8(%arg0: i32) -> (i32, i32) {
    %c0_i32 = arith.constant 0 : i32
    %c0_i32_0 = arith.constant 0 : i32
    return %arg0, %c0_i32 : i32, i32
  }
  func.func @transform_9(%arg0: i32) -> (i32, i32) {
    %c0_i32 = arith.constant 0 : i32
    %c0_i32_0 = arith.constant 0 : i32
    return %arg0, %c0_i32 : i32, i32
  }
}

</mosaic_0001>

<llo_original>
// kernel: tpu_custom_call.1
$region0: #{tpu_custom_call.1}
  #allocation0 [shape = 'u32[]', space=smem, size = 0x4, offset = 0x4, fixed_abs, tag = 'smem constant byte address 0x4 - core index']
  #allocation1 [shape = 'u32[144,128]{1,0:T(1,128)}', space=vmem, size = 0x12000, scoped, tag = 'internal scratch']
  %s0 = inlined_call_operand.vmem [shape: f32[8,32], index: 0, kind: input, shape index: {}, may-alias: {0,8}]
  %s1 = inlined_call_operand.vmem [shape: f32[1,64], index: 1, kind: input, shape index: {}]
  %s2 = inlined_call_operand.vmem [shape: bf16[16,128], index: 2, kind: input, shape index: {}]
  %s3 = inlined_call_operand.vmem [shape: f32[1,128], index: 3, kind: input, shape index: {}]
  %s4 = inlined_call_operand.hbm [shape: bf16[128,128], index: 4, kind: input, shape index: {}]
  %s5 = inlined_call_operand.vmem [shape: f32[1,128], index: 5, kind: input, shape index: {}]
  %s6 = inlined_call_operand.hbm [shape: bf16[128,128], index: 6, kind: input, shape index: {}]
  %s7 = inlined_call_operand.vmem [shape: f32[1,128], index: 7, kind: input, shape index: {}]
  %s8 = inlined_call_operand.vmem [shape: f32[8,32], index: 8, kind: output, shape index: {0}, may-alias: {0,8}]
  %s9 = inlined_call_operand.vmem [shape: f32[8,1], index: 9, kind: output, shape index: {1}]
  %10 = xla_tuple %s8, %s9
  %s11 = sld [smem:[#allocation0]]
  $region58: #{tpu_custom_call.1} parent=0
    _
  %s13 = ssub.s32 1, %s11
  %s14 = scalar_select 0, %s13, %s11
  $region1: #{tpu_custom_call.1} parent=0
    #allocation2 [shape = 'u8[32768]{0}', space=vmem, size = 0x8000, scoped, tag = 'input window, operand 4, single buffered']
    #allocation3 [shape = 's32[1]{0}', space=sflag, size = 0x4, scoped, tag = 'scoped memory for tpu_custom_call.1']
    #allocation4 [shape = 'u8[32768]{0}', space=vmem, size = 0x8000, scoped, tag = 'input window, operand 6, single buffered']
    #allocation5 [shape = 's32[1]{0}', space=sflag, size = 0x4, scoped, tag = 'scoped memory for tpu_custom_call.1']
    %15 = vsyncpa [#allocation3], 0
    %16 = vsyncpa [#allocation5], 0
    // Predicated region
    $region2: #{tpu_custom_call.1} parent=1 // pred_check
      _
    $region3: #{tpu_custom_call.1} parent=1 // pred_check_branch
      %18 = sbr.rel (0) target = $region5
    $region4: #{tpu_custom_call.1} parent=1 // pred_region
      _
    $region5: #{tpu_custom_call.1} parent=1 // pred_fallthru
      _
    // Predicated region
    $region6: #{tpu_custom_call.1} parent=1 // pred_check
      _
    $region7: #{tpu_custom_call.1} parent=1 // pred_check_branch
      %20 = sbr.rel (0) target = $region9
    $region8: #{tpu_custom_call.1} parent=1 // pred_region
      _
    $region9: #{tpu_custom_call.1} parent=1 // pred_fallthru
      _
    // Predicated region
    $region10: #{tpu_custom_call.1} parent=1 // pred_check
      _
    $region11: #{tpu_custom_call.1} parent=1 // pred_check_branch
      %22 = sbr.rel (0) target = $region13
    $region12: #{tpu_custom_call.1} parent=1 // pred_region
      _
    $region13: #{tpu_custom_call.1} parent=1 // pred_fallthru
      _
    // Predicated region
    $region14: #{tpu_custom_call.1} parent=1 // pred_check
      _
    $region15: #{tpu_custom_call.1} parent=1 // pred_check_branch
      %24 = sbr.rel (0) target = $region17
    $region16: #{tpu_custom_call.1} parent=1 // pred_region
      _
    $region17: #{tpu_custom_call.1} parent=1 // pred_fallthru
      _
    // Predicated region
    $region18: #{tpu_custom_call.1} parent=1 // pred_check
      _
    $region19: #{tpu_custom_call.1} parent=1 // pred_check_branch
      %26 = sbr.rel (0) target = $region21
    $region20: #{tpu_custom_call.1} parent=1 // pred_region
      %s28 = ssub.s32 1024, 1024
      %29 = vsyncadd [#allocation3], %s28
      %s30 = sshll.u32 [#allocation2], 4
      %s31 = int_to_ptr.vmem [resolvable:$true] %s30
      %36 = dma.hbm_to_vmem [thread:$0]  %s4, 1024, %s31, [#allocation3], 64, 64, 4
    $region21: #{tpu_custom_call.1} parent=1 // pred_fallthru
      _
    // Predicated region
    $region22: #{tpu_custom_call.1} parent=1 // pred_check
      _
    $region23: #{tpu_custom_call.1} parent=1 // pred_check_branch
      %38 = sbr.rel (0) target = $region25
    $region24: #{tpu_custom_call.1} parent=1 // pred_region
      _
    $region25: #{tpu_custom_call.1} parent=1 // pred_fallthru
      _
    // Predicated region
    $region26: #{tpu_custom_call.1} parent=1 // pred_check
      _
    $region27: #{tpu_custom_call.1} parent=1 // pred_check_branch
      %40 = sbr.rel (0) target = $region29
    $region28: #{tpu_custom_call.1} parent=1 // pred_region
      %s42 = ssub.s32 1024, 1024
      %43 = vsyncadd [#allocation5], %s42
      %s44 = sshll.u32 [#allocation4], 4
      %s45 = int_to_ptr.vmem [resolvable:$true] %s44
      %50 = dma.hbm_to_vmem [thread:$0]  %s6, 1024, %s45, [#allocation5], 64, 64, 4
    $region29: #{tpu_custom_call.1} parent=1 // pred_fallthru
      _
    // Predicated region
    $region30: #{tpu_custom_call.1} parent=1 // pred_check
      _
    $region31: #{tpu_custom_call.1} parent=1 // pred_check_branch
      %52 = sbr.rel (0) target = $region33
    $region32: #{tpu_custom_call.1} parent=1 // pred_region
      _
    $region33: #{tpu_custom_call.1} parent=1 // pred_fallthru
      _
    // Predicated region
    $region34: #{tpu_custom_call.1} parent=1 // pred_check
      _
    $region35: #{tpu_custom_call.1} parent=1 // pred_check_branch
      %54 = sbr.rel (0) target = $region37
    $region36: #{tpu_custom_call.1} parent=1 // pred_region
      %55 = dma.done [#allocation3], 1024
    $region37: #{tpu_custom_call.1} parent=1 // pred_fallthru
      _
    // Predicated region
    $region38: #{tpu_custom_call.1} parent=1 // pred_check
      _
    $region39: #{tpu_custom_call.1} parent=1 // pred_check_branch
      %57 = sbr.rel (0) target = $region41
    $region40: #{tpu_custom_call.1} parent=1 // pred_region
      %58 = dma.done [#allocation5], 1024
    $region41: #{tpu_custom_call.1} parent=1 // pred_fallthru
      _
    %v60 = vld [vmem:[%s0] sm:$0xff]
    %v61 = vpack.c.bf16 %v60, %v60
    %v62 = vld [vmem:[%s2] sm:$0xf]
    %v63 = vld [vmem:[%s2 + $0x4] sm:$0xf]
    %v64 = vld [vmem:[%s3] sm:$0x1]
    %v66 = vlaneseq
    %v67 = vshrl.u32 %v66, 7
    %v68 = vsub.s32 0, %v67
    %v69 = vrot.slane %v64, %v68
    %v73 = vunpack.c.l.b16 %v62
    %v74 = vunpack.c.l.b16 %v63
    %v75 = vpack.c.b16 %v74, %v73
    %vm77 = vcmask 130048
    %v79 = vsel %vm77, %v61, 0
    %81 = vmatprep.subr.bf16.mxu0 0
    %82 = vmatpush1.bf16.msra.mxu0 0
    %83 = vmatprep.subr.bf16.mxu0 0
    %84 = vmatpush1.bf16.msra.mxu0 0
    %85 = vmatprep.subr.bf16.mxu0 0
    %86 = vmatpush1.bf16.msra.mxu0 0
    %87 = vmatprep.subr.bf16.mxu0 0
    %88 = vmatpush1.bf16.msra.mxu0 0
    %89 = vmatprep.subr.bf16.mxu0 0
    %90 = vmatpush1.bf16.msra.mxu0 0
    %91 = vmatprep.subr.bf16.mxu0 0
    %92 = vmatpush1.bf16.msra.mxu0 0
    %93 = vmatprep.subr.bf16.mxu0 0
    %94 = vmatpush1.bf16.msra.mxu0 0
    %95 = vmatprep.subr.bf16.mxu0 0
    %96 = vmatpush1.bf16.msra.mxu0 %v75
    %97 = vmatprep.subr.bf16.mxu0 0
    %98 = vmatpush2.bf16.msra.mxu0 0
    %99 = vmatprep.subr.bf16.mxu0 0
    %100 = vmatpush2.bf16.msra.mxu0 0
    %101 = vmatprep.subr.bf16.mxu0 0
    %102 = vmatpush2.bf16.msra.mxu0 0
    %103 = vmatprep.subr.bf16.mxu0 0
    %104 = vmatpush2.bf16.msra.mxu0 0
    %105 = vmatprep.subr.bf16.mxu0 0
    %106 = vmatpush2.bf16.msra.mxu0 0
    %107 = vmatprep.subr.bf16.mxu0 0
    %108 = vmatpush2.bf16.msra.mxu0 0
    %109 = vmatprep.subr.bf16.mxu0 0
    %110 = vmatpush2.bf16.msra.mxu0 0
    %111 = vmatprep.subr.bf16.mxu0 0
    %112 = vmatpush2.bf16.msra.mxu0 0
    %113 = vmatprep.mubr.bf16.mxu0 0
    %114 = vmatmul.mubr.bf16.gmra.mxu0 %v79
    %v115 = vpop.f32.mrf.mxu0
    %v116 = vadd.f32 %v69, %v115
    %v117 = vpop.f32.mrf.mxu0
    %v118 = vpop.f32.mrf.mxu0
    %v119 = vpop.f32.mrf.mxu0
    %120 = vdwg.mxu0
    %v121 = vmax.f32 %v116, 0.0
    %v122 = vpack.c.bf16 %v121, %v121
    %v123 = vld [vmem:[#allocation2] sm:$0xf]
    %v124 = vld [vmem:[#allocation2 + $0x4] sm:$0xf]
    %v125 = vld [vmem:[#allocation2 + $0x8] sm:$0xf]
    %v126 = vld [vmem:[#allocation2 + $0xc] sm:$0xf]
    %v127 = vld [vmem:[#allocation2 + $0x10] sm:$0xf]
    %v128 = vld [vmem:[#allocation2 + $0x14] sm:$0xf]
    %v129 = vld [vmem:[#allocation2 + $0x18] sm:$0xf]
    %v130 = vld [vmem:[#allocation2 + $0x1c] sm:$0xf]
    %v131 = vld [vmem:[#allocation2 + $0x20] sm:$0xf]
    %v132 = vld [vmem:[#allocation2 + $0x24] sm:$0xf]
    %v133 = vld [vmem:[#allocation2 + $0x28] sm:$0xf]
    %v134 = vld [vmem:[#allocation2 + $0x2c] sm:$0xf]
    %v135 = vld [vmem:[#allocation2 + $0x30] sm:$0xf]
    %v136 = vld [vmem:[#allocation2 + $0x34] sm:$0xf]
    %v137 = vld [vmem:[#allocation2 + $0x38] sm:$0xf]
    %v138 = vld [vmem:[#allocation2 + $0x3c] sm:$0xf]
    %v139 = vld [vmem:[%s5] sm:$0x1]
    %v141 = vlaneseq
    %v142 = vshrl.u32 %v141, 7
    %v143 = vsub.s32 0, %v142
    %v144 = vrot.slane %v139, %v143
    %v162 = vunpack.c.l.b16 %v123
    %v163 = vunpack.c.l.b16 %v124
    %v164 = vunpack.c.l.b16 %v125
    %v165 = vunpack.c.l.b16 %v126
    %v166 = vunpack.c.l.b16 %v127
    %v167 = vunpack.c.l.b16 %v128
    %v168 = vunpack.c.l.b16 %v129
    %v169 = vunpack.c.l.b16 %v130
    %v170 = vunpack.c.l.b16 %v131
    %v171 = vunpack.c.l.b16 %v132
    %v172 = vunpack.c.l.b16 %v133
    %v173 = vunpack.c.l.b16 %v134
    %v174 = vunpack.c.l.b16 %v135
    %v175 = vunpack.c.l.b16 %v136
    %v176 = vunpack.c.l.b16 %v137
    %v177 = vunpack.c.l.b16 %v138
    %v178 = vpack.c.b16 %v163, %v162
    %v179 = vpack.c.b16 %v165, %v164
    %v180 = vpack.c.b16 %v167, %v166
    %v181 = vpack.c.b16 %v169, %v168
    %v182 = vpack.c.b16 %v171, %v170
    %v183 = vpack.c.b16 %v173, %v172
    %v184 = vpack.c.b16 %v175, %v174
    %v185 = vpack.c.b16 %v177, %v176
    %194 = vmatprep.subr.bf16.mxu0 0
    %195 = vmatpush1.bf16.msra.mxu0 %v185
    %196 = vmatprep.subr.bf16.mxu0 0
    %197 = vmatpush1.bf16.msra.mxu0 %v184
    %198 = vmatprep.subr.bf16.mxu0 0
    %199 = vmatpush1.bf16.msra.mxu0 %v183
    %200 = vmatprep.subr.bf16.mxu0 0
    %201 = vmatpush1.bf16.msra.mxu0 %v182
    %202 = vmatprep.subr.bf16.mxu0 0
    %203 = vmatpush1.bf16.msra.mxu0 %v181
    %204 = vmatprep.subr.bf16.mxu0 0
    %205 = vmatpush1.bf16.msra.mxu0 %v180
    %206 = vmatprep.subr.bf16.mxu0 0
    %207 = vmatpush1.bf16.msra.mxu0 %v179
    %208 = vmatprep.subr.bf16.mxu0 0
    %209 = vmatpush1.bf16.msra.mxu0 %v178
    %210 = vmatprep.subr.bf16.mxu0 0
    %211 = vmatpush2.bf16.msra.mxu0 0
    %212 = vmatprep.subr.bf16.mxu0 0
    %213 = vmatpush2.bf16.msra.mxu0 0
    %214 = vmatprep.subr.bf16.mxu0 0
    %215 = vmatpush2.bf16.msra.mxu0 0
    %216 = vmatprep.subr.bf16.mxu0 0
    %217 = vmatpush2.bf16.msra.mxu0 0
    %218 = vmatprep.subr.bf16.mxu0 0
    %219 = vmatpush2.bf16.msra.mxu0 0
    %220 = vmatprep.subr.bf16.mxu0 0
    %221 = vmatpush2.bf16.msra.mxu0 0
    %222 = vmatprep.subr.bf16.mxu0 0
    %223 = vmatpush2.bf16.msra.mxu0 0
    %224 = vmatprep.subr.bf16.mxu0 0
    %225 = vmatpush2.bf16.msra.mxu0 0
    %226 = vmatprep.mubr.bf16.mxu0 0
    %227 = vmatmul.mubr.bf16.gmra.mxu0 %v122
    %v228 = vpop.f32.mrf.mxu0
    %v229 = vadd.f32 %v144, %v228
    %v230 = vpop.f32.mrf.mxu0
    %v231 = vpop.f32.mrf.mxu0
    %v232 = vpop.f32.mrf.mxu0
    %233 = vdwg.mxu0
    %v234 = vmax.f32 %v229, 0.0
    %v235 = vpack.c.bf16 %v234, %v234
    %v236 = vld [vmem:[#allocation4] sm:$0xf]
    %v237 = vld [vmem:[#allocation4 + $0x4] sm:$0xf]
    %v238 = vld [vmem:[#allocation4 + $0x8] sm:$0xf]
    %v239 = vld [vmem:[#allocation4 + $0xc] sm:$0xf]
    %v240 = vld [vmem:[#allocation4 + $0x10] sm:$0xf]
    %v241 = vld [vmem:[#allocation4 + $0x14] sm:$0xf]
    %v242 = vld [vmem:[#allocation4 + $0x18] sm:$0xf]
    %v243 = vld [vmem:[#allocation4 + $0x1c] sm:$0xf]
    %v244 = vld [vmem:[#allocation4 + $0x20] sm:$0xf]
    %v245 = vld [vmem:[#allocation4 + $0x24] sm:$0xf]
    %v246 = vld [vmem:[#allocation4 + $0x28] sm:$0xf]
    %v247 = vld [vmem:[#allocation4 + $0x2c] sm:$0xf]
    %v248 = vld [vmem:[#allocation4 + $0x30] sm:$0xf]
    %v249 = vld [vmem:[#allocation4 + $0x34] sm:$0xf]
    %v250 = vld [vmem:[#allocation4 + $0x38] sm:$0xf]
    %v251 = vld [vmem:[#allocation4 + $0x3c] sm:$0xf]
    %v252 = vld [vmem:[%s7] sm:$0x1]
    %v254 = vlaneseq
    %v255 = vshrl.u32 %v254, 7
    %v256 = vsub.s32 0, %v255
    %v257 = vrot.slane %v252, %v256
    %v275 = vunpack.c.l.b16 %v236
    %v276 = vunpack.c.l.b16 %v237
    %v277 = vunpack.c.l.b16 %v238
    %v278 = vunpack.c.l.b16 %v239
    %v279 = vunpack.c.l.b16 %v240
    %v280 = vunpack.c.l.b16 %v241
    %v281 = vunpack.c.l.b16 %v242
    %v282 = vunpack.c.l.b16 %v243
    %v283 = vunpack.c.l.b16 %v244
    %v284 = vunpack.c.l.b16 %v245
    %v285 = vunpack.c.l.b16 %v246
    %v286 = vunpack.c.l.b16 %v247
    %v287 = vunpack.c.l.b16 %v248
    %v288 = vunpack.c.l.b16 %v249
    %v289 = vunpack.c.l.b16 %v250
    %v290 = vunpack.c.l.b16 %v251
    %v291 = vpack.c.b16 %v276, %v275
    %v292 = vpack.c.b16 %v278, %v277
    %v293 = vpack.c.b16 %v280, %v279
    %v294 = vpack.c.b16 %v282, %v281
    %v295 = vpack.c.b16 %v284, %v283
    %v296 = vpack.c.b16 %v286, %v285
    %v297 = vpack.c.b16 %v288, %v287
    %v298 = vpack.c.b16 %v290, %v289
    %307 = vmatprep.subr.bf16.mxu0 0
    %308 = vmatpush1.bf16.msra.mxu0 %v298
    %309 = vmatprep.subr.bf16.mxu0 0
    %310 = vmatpush1.bf16.msra.mxu0 %v297
    %311 = vmatprep.subr.bf16.mxu0 0
    %312 = vmatpush1.bf16.msra.mxu0 %v296
    %313 = vmatprep.subr.bf16.mxu0 0
    %314 = vmatpush1.bf16.msra.mxu0 %v295
    %315 = vmatprep.subr.bf16.mxu0 0
    %316 = vmatpush1.bf16.msra.mxu0 %v294
    %317 = vmatprep.subr.bf16.mxu0 0
    %318 = vmatpush1.bf16.msra.mxu0 %v293
    %319 = vmatprep.subr.bf16.mxu0 0
    %320 = vmatpush1.bf16.msra.mxu0 %v292
    %321 = vmatprep.subr.bf16.mxu0 0
    %322 = vmatpush1.bf16.msra.mxu0 %v291
    %323 = vmatprep.subr.bf16.mxu0 0
    %324 = vmatpush2.bf16.msra.mxu0 0
    %325 = vmatprep.subr.bf16.mxu0 0
    %326 = vmatpush2.bf16.msra.mxu0 0
    %327 = vmatprep.subr.bf16.mxu0 0
    %328 = vmatpush2.bf16.msra.mxu0 0
    %329 = vmatprep.subr.bf16.mxu0 0
    %330 = vmatpush2.bf16.msra.mxu0 0
    %331 = vmatprep.subr.bf16.mxu0 0
    %332 = vmatpush2.bf16.msra.mxu0 0
    %333 = vmatprep.subr.bf16.mxu0 0
    %334 = vmatpush2.bf16.msra.mxu0 0
    %335 = vmatprep.subr.bf16.mxu0 0
    %336 = vmatpush2.bf16.msra.mxu0 0
    %337 = vmatprep.subr.bf16.mxu0 0
    %338 = vmatpush2.bf16.msra.mxu0 0
    %339 = vmatprep.mubr.bf16.mxu0 0
    %340 = vmatmul.mubr.bf16.gmra.mxu0 %v235
    %v341 = vpop.f32.mrf.mxu0
    %v342 = vadd.f32 %v257, %v341
    %v343 = vpop.f32.mrf.mxu0
    %v344 = vpop.f32.mrf.mxu0
    %v345 = vpop.f32.mrf.mxu0
    %346 = vdwg.mxu0
    %v347 = vtanh.pop %v342
    %v348 = vmul.f32 %v347, 1.442695
    %v349 = vpow.pop %v348
    %351 = vrot.lane.b32.xlu0 %v349, 16
    %v352 = vpop.permute.xlu0 %351
    %v354 = vmul.f32 %v60, %v352
    %356 = vrot.lane.b32.xlu0 %v342, 80
    %v357 = vpop.permute.xlu0 %356
    %v359 = vadd.f32 %v354, %v357
    %v360 = vmul.f32 %v359, %v349
    %361 = vrot.lane.b32.xlu0 %v342, 64
    %v362 = vpop.permute.xlu0 %361
    %v364 = vadd.f32 %v360, %v362
    %365 = vrot.lane.b32.xlu0 %v349, 112
    %v366 = vpop.permute.xlu0 %365
    %v368 = vmul.f32 %v364, %v366
    %369 = vrot.lane.b32.xlu0 %v342, 48
    %v370 = vpop.permute.xlu0 %369
    %v372 = vadd.f32 %v368, %v370
    %373 = vrot.lane.b32.xlu0 %v349, 96
    %v374 = vpop.permute.xlu0 %373
    %v376 = vmul.f32 %v372, %v374
    %377 = vrot.lane.b32.xlu0 %v342, 32
    %v378 = vpop.permute.xlu0 %377
    %v380 = vadd.f32 %v376, %v378
    %v381 = vld [vmem:[%s1] sm:$0x1]
    %v383 = vlaneseq
    %v384 = vshrl.u32 %v383, 7
    %v385 = vsub.s32 0, %v384
    %v386 = vrot.slane %v381, %v385
    %v388 = vmul.f32 %v347, %v386
    %vm389 = vcmask 523264
    %v390 = vsel %vm389, %v388, 0.0
    %391 = vadd.xlane.f32.xlu0 %v390
    %v392 = vpop.xlane.xlu0 %391
    %vm393 = vcmask 7168
    %394 = vst.msk [vmem:[%s9] sm:$0xff] %vm393, %v392
    %395 = vst.msk [vmem:[%s8] sm:$0xff] %vm77, %v60
    %vm396 = vcmask 261248
    %397 = vst.msk [vmem:[%s8] sm:$0xff] %vm396, %v380
    // Predicated region
    $region42: #{tpu_custom_call.1} parent=1 // pred_check
      _
    $region43: #{tpu_custom_call.1} parent=1 // pred_check_branch
      %399 = sbr.rel (0) target = $region45
    $region44: #{tpu_custom_call.1} parent=1 // pred_region
      _
    $region45: #{tpu_custom_call.1} parent=1 // pred_fallthru
      _
    // Predicated region
    $region46: #{tpu_custom_call.1} parent=1 // pred_check
      _
    $region47: #{tpu_custom_call.1} parent=1 // pred_check_branch
      %401 = sbr.rel (0) target = $region49
    $region48: #{tpu_custom_call.1} parent=1 // pred_region
      _
    $region49: #{tpu_custom_call.1} parent=1 // pred_fallthru
      _
    // Predicated region
    $region50: #{tpu_custom_call.1} parent=1 // pred_check
      _
    $region51: #{tpu_custom_call.1} parent=1 // pred_check_branch
      %403 = sbr.rel (0) target = $region53
    $region52: #{tpu_custom_call.1} parent=1 // pred_region
      _
    $region53: #{tpu_custom_call.1} parent=1 // pred_fallthru
      _
    // Predicated region
    $region54: #{tpu_custom_call.1} parent=1 // pred_check
      _
    $region55: #{tpu_custom_call.1} parent=1 // pred_check_branch
      %405 = sbr.rel (0) target = $region57
    $region56: #{tpu_custom_call.1} parent=1 // pred_region
      _
    $region57: #{tpu_custom_call.1} parent=1 // pred_fallthru
      _
    %406 = vsyncpa [#allocation3], 1
    %407 = vsyncpa [#allocation5], 1

</llo_original>
